<compile_context>
chip_gen: v5e
topology: v5e:2x2
jax: 0.10.0
libtpu: 0.0.40
codegen_flags: <defaults>
</compile_context>

<pallas_src>
import functools

import numpy as np
import jax
import jax.numpy as jnp
from jax.experimental import pallas as pl
from jax.experimental.pallas import tpu as pltpu

EPS = 1e-9


def _cos_sdr_kernel(pred_ref, targ_ref, out_ref, *, chunk_tile, num_chunks,
                    inv_num_chunks):
    """One (batch, chunk-tile) block: partial sum of -cos(t, o) over its chunks."""
    tile = pl.program_id(1)

    o = pred_ref[0].astype(jnp.float32)               # (CT, chunk_size)
    t = targ_ref[0].astype(jnp.float32)               # (CT, chunk_size)

    num = jnp.sum(t * o, axis=-1, keepdims=True)      # (CT, 1)  <t, o>
    tt = jnp.sum(t * t, axis=-1, keepdims=True)       # (CT, 1)  ||t||^2
    oo = jnp.sum(o * o, axis=-1, keepdims=True)       # (CT, 1)  ||o||^2
    den = jnp.sqrt(tt * oo)                           # one EUP sqrt per chunk
    per_chunk = -num / (den + EPS)                    # (CT, 1)

    # Mask padded rows of the edge tile (C % CT != 0): those rows contain
    # unspecified data and must not contribute to the mean.
    row = jax.lax.broadcasted_iota(jnp.int32, per_chunk.shape, 0)
    valid = (tile * chunk_tile + row) < num_chunks
    partial = jnp.sum(jnp.where(valid, per_chunk, 0.0)) * inv_num_chunks

    # Lane-dense, unmasked full-tile store of the per-(batch, tile) partial.
    out_ref[...] = jnp.full(out_ref.shape, partial, jnp.float32)


def cos_sdr_loss(output, target, chunk_size=1024, chunk_tile=256):
    """Pallas implementation of CosSDRLoss.forward (reduction = mean)."""
    assert output.shape == target.shape and output.ndim == 2
    assert chunk_tile % 8 == 0, "chunk_tile must be a multiple of 8 (sublanes)"
    B, L = output.shape
    C = L // chunk_size
    assert C > 0, "input shorter than one chunk"
    Lc = C * chunk_size

    if Lc != L:
        # TODO(synk): feed chunk-aligned lengths to make this slice a no-op;
        # for unaligned L, XLA materializes one truncated copy per operand
        # before the kernel (the kernel itself never forces a copy).
        output = output[:, :Lc]
        target = target[:, :Lc]

    # Reshape of a contiguous (B, Lc) buffer: pure bitcast, no data movement.
    pred = output.reshape(B, C, chunk_size)
    targ = target.reshape(B, C, chunk_size)

    ct = C if C <= chunk_tile else chunk_tile         # chunks per tile
    nt = pl.cdiv(C, ct)                               # chunk tiles per batch

    kernel = functools.partial(
        _cos_sdr_kernel, chunk_tile=ct, num_chunks=C, inv_num_chunks=1.0 / C)

    in_bytes = 2 * B * C * chunk_size * pred.dtype.itemsize
    cost = pl.CostEstimate(
        flops=6 * B * C * chunk_size,                 # 3 muls + 3 adds / sample
        transcendentals=B * C,                        # one sqrt per chunk
        bytes_accessed=in_bytes + B * nt * 8 * 128 * 4,
    )

    per_tile = pl.pallas_call(
        kernel,
        out_shape=jax.ShapeDtypeStruct((B, nt, 8, 128), jnp.float32),
        grid=(B, nt),
        in_specs=[
            pl.BlockSpec((1, ct, chunk_size), lambda b, t: (b, t, 0)),
            pl.BlockSpec((1, ct, chunk_size), lambda b, t: (b, t, 0)),
        ],
        out_specs=pl.BlockSpec((1, 1, 8, 128), lambda b, t: (b, t, 0, 0)),
        compiler_params=pltpu.CompilerParams(
            dimension_semantics=("parallel", "parallel")),
        cost_estimate=cost,
    )(pred, targ)

    # Tiny final reduction in plain JAX: sum tiles per batch, mean over batch.
    per_batch = jnp.sum(per_tile[:, :, 0, 0], axis=1)
    return jnp.mean(per_batch)


def _ref_cos_sdr_loss(output, target, chunk_size=1024):
    """Pure-JAX reference mirroring the PyTorch module."""
    B, L = output.shape
    Lc = L - L % chunk_size
    o = output[:, :Lc].reshape(B, -1, chunk_size)
    t = target[:, :Lc].reshape(B, -1, chunk_size)
    num = jnp.sum(t * o, axis=-1)
    den = jnp.linalg.norm(t, axis=-1) * jnp.linalg.norm(o, axis=-1)
    per_chunk = -num / (den + EPS)
    return jnp.mean(jnp.mean(per_chunk, axis=-1))


if __name__ == "__main__":
    key = jax.random.PRNGKey(0)
    k1, k2, k3, k4 = jax.random.split(key, 4)

    chunk = 1024  # module default

    # Case 1: chunk-aligned length (free-reshape fast path), single tile.
    B1, L1 = 2, 4 * chunk
    p1 = jax.random.normal(k1, (B1, L1), dtype=jnp.float32)
    t1 = jax.random.normal(k2, (B1, L1), dtype=jnp.float32)
    loss1 = cos_sdr_loss(p1, t1, chunk_size=chunk)
    jax.block_until_ready(loss1)
    np.testing.assert_allclose(np.asarray(loss1),
                               np.asarray(_ref_cos_sdr_loss(p1, t1, chunk)),
                               rtol=1e-5, atol=1e-6)

    # Case 2: unaligned length (exercises truncation) + multiple chunk tiles
    # with a masked edge tile: C=20, chunk_tile=8 -> 3 tiles, last half-valid.
    B2, L2 = 3, 20 * chunk + 123
    p2 = jax.random.normal(k3, (B2, L2), dtype=jnp.float32)
    t2 = jax.random.normal(k4, (B2, L2), dtype=jnp.float32)
    loss2 = cos_sdr_loss(p2, t2, chunk_size=chunk, chunk_tile=8)
    jax.block_until_ready(loss2)
    np.testing.assert_allclose(np.asarray(loss2),
                               np.asarray(_ref_cos_sdr_loss(p2, t2, chunk)),
                               rtol=1e-5, atol=1e-6)

    print("KERNEL_OK")
</pallas_src>

<mosaic_0001>
module attributes {stable_mosaic.version = 11 : i64} {
  func.func @_cos_sdr_kernel(%arg0: i32, %arg1: i32, %arg2: memref<1x4x1024xf32, #tpu.memory_space<vmem>>, %arg3: memref<1x4x1024xf32, #tpu.memory_space<vmem>>, %arg4: memref<1x1x8x128xf32, #tpu.memory_space<vmem>>) attributes {dimension_semantics = [#tpu.dimension_semantics<parallel>, #tpu.dimension_semantics<parallel>], iteration_bounds = array<i64: 2, 1>, scalar_prefetch = 0 : i64, scratch_operands = 0 : i64, tpu.core_type = #tpu.core_type<tc>, window_params = [{transform_indices = @transform_0, window_bounds = array<i64: 1, 4, 1024>}, {transform_indices = @transform_1, window_bounds = array<i64: 1, 4, 1024>}, {transform_indices = @transform_2, window_bounds = array<i64: 1, 1, 8, 128>}]} {
    %c0 = arith.constant 0 : index
    %c0_0 = arith.constant 0 : index
    %c0_1 = arith.constant 0 : index
    %0 = vector.load %arg2[%c0, %c0_0, %c0_1] : memref<1x4x1024xf32, #tpu.memory_space<vmem>>, vector<1x4x1024xf32>
    %1 = vector.shape_cast %0 : vector<1x4x1024xf32> to vector<4x1024xf32>
    %c0_2 = arith.constant 0 : index
    %c0_3 = arith.constant 0 : index
    %c0_4 = arith.constant 0 : index
    %2 = vector.load %arg3[%c0_2, %c0_3, %c0_4] : memref<1x4x1024xf32, #tpu.memory_space<vmem>>, vector<1x4x1024xf32>
    %3 = vector.shape_cast %2 : vector<1x4x1024xf32> to vector<4x1024xf32>
    %4 = arith.mulf %3, %1 : vector<4x1024xf32>
    %cst = arith.constant dense<0.000000e+00> : vector<4xf32>
    %5 = vector.multi_reduction <add>, %4, %cst [1] : vector<4x1024xf32> to vector<4xf32>
    %6 = vector.shape_cast %5 : vector<4xf32> to vector<4x1xf32>
    %7 = arith.mulf %3, %3 : vector<4x1024xf32>
    %cst_5 = arith.constant dense<0.000000e+00> : vector<4xf32>
    %8 = vector.multi_reduction <add>, %7, %cst_5 [1] : vector<4x1024xf32> to vector<4xf32>
    %9 = vector.shape_cast %8 : vector<4xf32> to vector<4x1xf32>
    %10 = arith.mulf %1, %1 : vector<4x1024xf32>
    %cst_6 = arith.constant dense<0.000000e+00> : vector<4xf32>
    %11 = vector.multi_reduction <add>, %10, %cst_6 [1] : vector<4x1024xf32> to vector<4xf32>
    %12 = vector.shape_cast %11 : vector<4xf32> to vector<4x1xf32>
    %13 = arith.mulf %9, %12 : vector<4x1xf32>
    %14 = math.sqrt %13 : vector<4x1xf32>
    %cst_7 = arith.constant 0.000000e+00 : f32
    %15 = vector.broadcast %cst_7 : f32 to vector<4x1xf32>
    %16 = arith.subf %15, %6 : vector<4x1xf32>
    %cst_8 = arith.constant 9.99999971E-10 : f32
    %17 = vector.broadcast %cst_8 : f32 to vector<4x1xf32>
    %18 = arith.addf %14, %17 : vector<4x1xf32>
    %19 = arith.divf %16, %18 : vector<4x1xf32>
    %20 = tpu.iota {dimensions = array<i32: 0>} : vector<4x1xi32>
    %c4_i32 = arith.constant 4 : i32
    %21 = arith.muli %arg1, %c4_i32 : i32
    %22 = vector.broadcast %21 : i32 to vector<4x1xi32>
    %23 = arith.addi %22, %20 : vector<4x1xi32>
    %c4_i32_9 = arith.constant 4 : i32
    %24 = vector.broadcast %c4_i32_9 : i32 to vector<4x1xi32>
    %25 = arith.cmpi slt, %23, %24 : vector<4x1xi32>
    %cst_10 = arith.constant 0.000000e+00 : f32
    %26 = vector.broadcast %cst_10 : f32 to vector<4x1xf32>
    %27 = arith.select %25, %19, %26 : vector<4x1xi1>, vector<4x1xf32>
    %28 = vector.shape_cast %27 : vector<4x1xf32> to vector<1x4x1xf32>
    %cst_11 = arith.constant dense<0.000000e+00> : vector<1xf32>
    %29 = vector.multi_reduction <add>, %28, %cst_11 [1, 2] : vector<1x4x1xf32> to vector<1xf32>
    %30 = vector.shape_cast %29 : vector<1xf32> to vector<1x1x1xf32>
    %31 = vector.extract %30[0, 0, 0] : f32 from vector<1x1x1xf32>
    %cst_12 = arith.constant 2.500000e-01 : f32
    %32 = arith.mulf %31, %cst_12 : f32
    %33 = vector.broadcast %32 : f32 to vector<1x1x8x128xf32>
    %c0_13 = arith.constant 0 : index
    %c0_14 = arith.constant 0 : index
    %c0_15 = arith.constant 0 : index
    %c0_16 = arith.constant 0 : index
    %34 = vector.load %arg4[%c0_13, %c0_14, %c0_15, %c0_16] : memref<1x1x8x128xf32, #tpu.memory_space<vmem>>, vector<1x1x8x128xf32>
    tpu.vector_store %arg4[%c0_13, %c0_14, %c0_15, %c0_16], %33 {strides = array<i32>} : memref<1x1x8x128xf32, #tpu.memory_space<vmem>>, vector<1x1x8x128xf32>,
    return
  }
  func.func @transform_0(%arg0: i32, %arg1: i32) -> (i32, i32, i32) {
    %c0_i32 = arith.constant 0 : i32
    %c0_i32_0 = arith.constant 0 : i32
    return %arg0, %arg1, %c0_i32 : i32, i32, i32
  }
  func.func @transform_1(%arg0: i32, %arg1: i32) -> (i32, i32, i32) {
    %c0_i32 = arith.constant 0 : i32
    %c0_i32_0 = arith.constant 0 : i32
    return %arg0, %arg1, %c0_i32 : i32, i32, i32
  }
  func.func @transform_2(%arg0: i32, %arg1: i32) -> (i32, i32, i32, i32) {
    %c0_i32 = arith.constant 0 : i32
    %c0_i32_0 = arith.constant 0 : i32
    %c0_i32_1 = arith.constant 0 : i32
    return %arg0, %arg1, %c0_i32, %c0_i32_0 : i32, i32, i32, i32
  }
}

</mosaic_0001>

<llo_original>
// kernel: tpu_custom_call.1
$region0: #{tpu_custom_call.1}
  #allocation0 [shape = 'u32[]', space=smem, size = 0x4, offset = 0x4, fixed_abs, tag = 'smem constant byte address 0x4 - core index']
  #allocation1 [shape = 'u32[72,128]{1,0:T(1,128)}', space=vmem, size = 0x9000, scoped, tag = 'internal scratch']
  %s0 = inlined_call_operand.hbm [shape: f32[2,4,1024], index: 0, kind: input, shape index: {}]
  %s1 = inlined_call_operand.hbm [shape: f32[2,4,1024], index: 1, kind: input, shape index: {}]
  %s2 = inlined_call_operand.hbm [shape: f32[2,1,8,128], index: 2, kind: output, shape index: {}]
  %s3 = sld [smem:[#allocation0]]
  $region49: #{tpu_custom_call.1} parent=0
    _
  %s5 = ssub.s32 1, %s3
  %s6 = scalar_select 0, %s5, %s3
  $region1: #{tpu_custom_call.1} parent=0
    #allocation2 [shape = 'u8[32768]{0}', space=vmem, size = 0x8000, scoped, tag = 'input window, operand 0']
    #allocation3 [shape = 's32[2]{0}', space=sflag, size = 0x8, scoped, tag = 'scoped memory for tpu_custom_call.1']
    #allocation4 [shape = 's32[2]{0}', space=sflag, size = 0x8, scoped, tag = 'scoped memory for tpu_custom_call.1']
    #allocation5 [shape = 'u8[32768]{0}', space=vmem, size = 0x8000, scoped, tag = 'input window, operand 1']
    #allocation6 [shape = 's32[2]{0}', space=sflag, size = 0x8, scoped, tag = 'scoped memory for tpu_custom_call.1']
    #allocation7 [shape = 'u8[8192]{0}', space=vmem, size = 0x2000, scoped, tag = 'output window, operand 0']
    %7 = vsyncpa [#allocation3], 0
    %s8 = scalar_lea.sflag [#allocation3], 1
    %9 = vsyncpa %s8, 0
    %10 = vsyncpa [#allocation6], 0
    %s11 = scalar_lea.sflag [#allocation6], 1
    %12 = vsyncpa %s11, 0
    %13 = vsyncpa [#allocation4], 0
    %s14 = scalar_lea.sflag [#allocation4], 1
    %15 = vsyncpa %s14, 0
    loop: start=0, step=1, limit=4
    $region2: #{tpu_custom_call.1} parent=1 // loop_pre_header
      _
    $region3: #{tpu_custom_call.1} parent=1 // loop_header
      %s17 = sphi 0, %s21
      %p18 = scmp.ge.s32.totalorder %s17, 4
      %s24 = sphi 0, %s36
      %s25 = sphi 0, %s32
      %s26 = sphi 0, %s24
      %s27 = sphi 0, %s25
      %s28 = sphi 0, %s26
      %s29 = sphi 0, %s27
      %s41 = sphi 0, %s43
      %s44 = sphi 0, %s41
      %s45 = sphi 0, %s44
      %s61 = sphi 0, %s45
      %s69 = sphi 0, %s71
      %s72 = sphi 0, %s69
      %s73 = sphi 0, %s72
      %s89 = sphi 0, %s73
      %s97 = sphi 0, %s99
      %s100 = sphi 0, %s97
      %s101 = sphi 0, %s100
      %s117 = sphi 0, %s101
    $region4: #{tpu_custom_call.1} parent=1 // loop_header_branch
      %20 = sbr.rel (%p18) target = $region8
    $region5: #{tpu_custom_call.1} parent=1 // loop_body
      %s22 = ssub.s32 %s17, 1
      %s23 = ssub.s32 %s17, 2
      %s30 = sadd.s32 1, %s25
      %p31 = scmp.ge.s32.totalorder %s30, 1
      %s32 = scalar_select %p31, 0, %s30
      %s33 = sadd.s32 1, %s24
      %s34 = scalar_select %p31, %s33, %s24
      %p35 = scmp.ge.s32.totalorder %s34, 2
      %s36 = scalar_select %p35, 0, %s34
      %s37 = ssub.s32 %s24, %s36
      %s38 = ssub.s32 %s25, %s32
      %s39 = sor.u32 %s37, %s38
      %p40 = scmp.eq.s32.totalorder %s39, 0
      %s42 = sadd.s32 %s41, 1
      %s43 = scalar_select %p40, %s41, %s42
      %p46 = pneg %p40
      %p47 = scmp.eq.s32.totalorder %s17, 1
      %p48 = por %p46, %p47
      %p49 = scmp.ne.s32.totalorder %s41, %s44
      %p50 = scmp.eq.s32.totalorder %s17, 0
      %p51 = por %p49, %p50
      %p52 = scmp.ne.s32.totalorder %s41, %s44
      %p53 = scmp.eq.s32.totalorder %s22, 1
      %p54 = por %p52, %p53
      %p55 = scmp.ne.s32.totalorder %s44, %s45
      %p56 = scmp.eq.s32.totalorder %s22, 0
      %p57 = por %p55, %p56
      %p58 = scmp.ne.s32.totalorder %s44, %s45
      %p59 = scmp.eq.s32.totalorder %s23, 1
      %p60 = por %p58, %p59
      %p62 = scmp.ne.s32.totalorder %s45, %s61
      %p63 = scmp.eq.s32.totalorder %s23, 0
      %p64 = por %p62, %p63
      %s65 = ssub.s32 %s24, %s36
      %s66 = ssub.s32 %s25, %s32
      %s67 = sor.u32 %s65, %s66
      %p68 = scmp.eq.s32.totalorder %s67, 0
      %s70 = sadd.s32 %s69, 1
      %s71 = scalar_select %p68, %s69, %s70
      %p74 = pneg %p68
      %p75 = scmp.eq.s32.totalorder %s17, 1
      %p76 = por %p74, %p75
      %p77 = scmp.ne.s32.totalorder %s69, %s72
      %p78 = scmp.eq.s32.totalorder %s17, 0
      %p79 = por %p77, %p78
      %p80 = scmp.ne.s32.totalorder %s69, %s72
      %p81 = scmp.eq.s32.totalorder %s22, 1
      %p82 = por %p80, %p81
      %p83 = scmp.ne.s32.totalorder %s72, %s73
      %p84 = scmp.eq.s32.totalorder %s22, 0
      %p85 = por %p83, %p84
      %p86 = scmp.ne.s32.totalorder %s72, %s73
      %p87 = scmp.eq.s32.totalorder %s23, 1
      %p88 = por %p86, %p87
      %p90 = scmp.ne.s32.totalorder %s73, %s89
      %p91 = scmp.eq.s32.totalorder %s23, 0
      %p92 = por %p90, %p91
      %s93 = ssub.s32 %s24, %s36
      %s94 = ssub.s32 %s25, %s32
      %s95 = sor.u32 %s93, %s94
      %p96 = scmp.eq.s32.totalorder %s95, 0
      %s98 = sadd.s32 %s97, 1
      %s99 = scalar_select %p96, %s97, %s98
      %p102 = pneg %p96
      %p103 = scmp.eq.s32.totalorder %s17, 1
      %p104 = por %p102, %p103
      %p105 = scmp.ne.s32.totalorder %s97, %s100
      %p106 = scmp.eq.s32.totalorder %s17, 0
      %p107 = por %p105, %p106
      %p108 = scmp.ne.s32.totalorder %s97, %s100
      %p109 = scmp.eq.s32.totalorder %s22, 1
      %p110 = por %p108, %p109
      %p111 = scmp.ne.s32.totalorder %s100, %s101
      %p112 = scmp.eq.s32.totalorder %s22, 0
      %p113 = por %p111, %p112
      %p114 = scmp.ne.s32.totalorder %s100, %s101
      %p115 = scmp.eq.s32.totalorder %s23, 1
      %p116 = por %p114, %p115
      %p118 = scmp.ne.s32.totalorder %s101, %s117
      %p119 = scmp.eq.s32.totalorder %s23, 0
      %p120 = por %p118, %p119
      %p121 = scmp.le.s32.totalorder 1, %s17
      %p122 = scmp.lt.s32.totalorder %s17, 3
      %p123 = pnand %p121, %p122
      %p124 = pneg %p123
      // Predicated region
      $region9: #{tpu_custom_call.1} parent=5 // pred_check
        _
      $region10: #{tpu_custom_call.1} parent=5 // pred_check_branch
        %126 = sbr.rel (%p123) target = $region12
      $region11: #{tpu_custom_call.1} parent=5 // pred_region
        %s127 = ssub.s32 %s17, 1
      $region12: #{tpu_custom_call.1} parent=5 // pred_fallthru
        _
      %p128 = scmp.lt.s32.totalorder %s17, 2
      // Predicated region
      $region13: #{tpu_custom_call.1} parent=5 // pred_check
        %p129 = pneg %p128
      $region14: #{tpu_custom_call.1} parent=5 // pred_check_branch
        %131 = sbr.rel (%p129) target = $region16
      $region15: #{tpu_custom_call.1} parent=5 // pred_region
        // Predicated region
        $region17: #{tpu_custom_call.1} parent=15 // pred_check
          %p132 = pneg %p51
        $region18: #{tpu_custom_call.1} parent=15 // pred_check_branch
          %134 = sbr.rel (%p132) target = $region20
        $region19: #{tpu_custom_call.1} parent=15 // pred_region
          %s135 = sand.u32 %s41, 1
          %s136 = scalar_lea.sflag [#allocation3], %s135
          %s137 = sand.u32 %s41, 1
          %s138 = smul.addr %s137, 32
          %s139 = scalar_lea.vmem [#allocation2], %s138
          %141 = vsyncadd %s136, 0
          %s142 = smul.addr %s25, 8
          %s143 = smul.addr %s24, 8
          %s144 = sadd.s32 %s142, %s143
          %s145 = smul.addr %s144, 4
          %s146 = scalar_lea.hbm %s0, %s145
          %s148 = sshll.u32 %s146, 4
          %s149 = int_to_ptr.hbm [resolvable:$true] %s148
          %s150 = sshll.u32 %s139, 4
          %s151 = int_to_ptr.vmem [resolvable:$true] %s150
          %153 = dma.hbm_to_vmem [thread:$0]  %s149, 512, %s151, %s136
        $region20: #{tpu_custom_call.1} parent=15 // pred_fallthru
          _
        // Predicated region
        $region21: #{tpu_custom_call.1} parent=15 // pred_check
          %p154 = pneg %p79
        $region22: #{tpu_custom_call.1} parent=15 // pred_check_branch
          %156 = sbr.rel (%p154) target = $region24
        $region23: #{tpu_custom_call.1} parent=15 // pred_region
          %s157 = sand.u32 %s69, 1
          %s158 = scalar_lea.sflag [#allocation6], %s157
          %s159 = sand.u32 %s69, 1
          %s160 = smul.addr %s159, 32
          %s161 = scalar_lea.vmem [#allocation5], %s160
          %163 = vsyncadd %s158, 0
          %s164 = smul.addr %s25, 8
          %s165 = smul.addr %s24, 8
          %s166 = sadd.s32 %s164, %s165
          %s167 = smul.addr %s166, 4
          %s168 = scalar_lea.hbm %s1, %s167
          %s170 = sshll.u32 %s168, 4
          %s171 = int_to_ptr.hbm [resolvable:$true] %s170
          %s172 = sshll.u32 %s161, 4
          %s173 = int_to_ptr.vmem [resolvable:$true] %s172
          %175 = dma.hbm_to_vmem [thread:$0]  %s171, 512, %s173, %s158
        $region24: #{tpu_custom_call.1} parent=15 // pred_fallthru
          _
      $region16: #{tpu_custom_call.1} parent=5 // pred_fallthru
        _
      %p176 = scmp.le.s32.totalorder 1, %s17
      %p177 = scmp.lt.s32.totalorder %s17, 3
      %p178 = pnand %p176, %p177
      %p179 = pneg %p178
      // Predicated region
      $region25: #{tpu_custom_call.1} parent=5 // pred_check
        _
      $region26: #{tpu_custom_call.1} parent=5 // pred_check_branch
        %181 = sbr.rel (%p178) target = $region28
      $region27: #{tpu_custom_call.1} parent=5 // pred_region
        %s182 = ssub.s32 %s17, 1
        %s183 = sand.u32 %s44, 1
        %s184 = scalar_lea.sflag [#allocation3], %s183
        %s185 = sand.u32 %s44, 1
        %s186 = smul.addr %s185, 32
        %s187 = scalar_lea.vmem [#allocation2], %s186
        // Predicated region
        $region29: #{tpu_custom_call.1} parent=27 // pred_check
          %p188 = pneg %p57
        $region30: #{tpu_custom_call.1} parent=27 // pred_check_branch
          %190 = sbr.rel (%p188) target = $region32
        $region31: #{tpu_custom_call.1} parent=27 // pred_region
          %192 = dma.done %s184, 512
        $region32: #{tpu_custom_call.1} parent=27 // pred_fallthru
          _
        %s193 = sand.u32 %s72, 1
        %s194 = scalar_lea.sflag [#allocation6], %s193
        %s195 = sand.u32 %s72, 1
        %s196 = smul.addr %s195, 32
        %s197 = scalar_lea.vmem [#allocation5], %s196
        // Predicated region
        $region33: #{tpu_custom_call.1} parent=27 // pred_check
          %p198 = pneg %p85
        $region34: #{tpu_custom_call.1} parent=27 // pred_check_branch
          %200 = sbr.rel (%p198) target = $region36
        $region35: #{tpu_custom_call.1} parent=27 // pred_region
          %202 = dma.done %s194, 512
        $region36: #{tpu_custom_call.1} parent=27 // pred_fallthru
          _
        %s203 = sand.u32 %s44, 1
        %s204 = scalar_lea.sflag [#allocation3], %s203
        %s205 = sand.u32 %s44, 1
        %s206 = smul.addr %s205, 32
        %s207 = scalar_lea.vmem [#allocation2], %s206
        %p208 = pneg %p57
        %p209 = pneg %p54
        %s210 = sand.u32 %s72, 1
        %s211 = scalar_lea.sflag [#allocation6], %s210
        %s212 = sand.u32 %s72, 1
        %s213 = smul.addr %s212, 32
        %s214 = scalar_lea.vmem [#allocation5], %s213
        %p215 = pneg %p85
        %p216 = pneg %p82
        %p217 = pneg %p113
        %p218 = pneg %p110
        %s219 = sand.u32 %s100, 1
        %s220 = scalar_lea.sflag [#allocation4], %s219
        %s221 = sand.u32 %s100, 1
        %s222 = smul.addr %s221, 8
        %s223 = scalar_lea.vmem [#allocation7], %s222
        %v224 = vld [vmem:[%s187] sm:$0xff]
        %v225 = vld [vmem:[%s187 + $0x8] sm:$0xff]
        %v226 = vld [vmem:[%s187 + $0x10] sm:$0xff]
        %v227 = vld [vmem:[%s187 + $0x18] sm:$0xff]
        %v228 = vld [vmem:[%s197] sm:$0xff]
        %v229 = vld [vmem:[%s197 + $0x8] sm:$0xff]
        %v230 = vld [vmem:[%s197 + $0x10] sm:$0xff]
        %v231 = vld [vmem:[%s197 + $0x18] sm:$0xff]
        %v232 = vmul.f32 %v228, %v224
        %v233 = vmul.f32 %v229, %v225
        %v234 = vmul.f32 %v230, %v226
        %v235 = vmul.f32 %v231, %v227
        %240 = vst [vmem:[#allocation1] ss:$2 sm:$0xff] %v232
        %s241 = scalar_lea.vmem [#allocation1], 16
        %242 = vst [vmem:[%s241] ss:$2 sm:$0xff] %v233
        %s243 = scalar_lea.vmem [#allocation1], 32
        %244 = vst [vmem:[%s243] ss:$2 sm:$0xff] %v234
        %s245 = scalar_lea.vmem [#allocation1], 48
        %246 = vst [vmem:[%s245] ss:$2 sm:$0xff] %v235
        %v247 = vld.sshfl [vmem:[#allocation1] sm:$0xff pattern:$0x75316420]
        %v248 = vld.sshfl [vmem:[#allocation1 + $0x8] sm:$0xff pattern:$0x75316420]
        %v249 = vld.sshfl [vmem:[#allocation1 + $0x10] sm:$0xff pattern:$0x75316420]
        %v250 = vld.sshfl [vmem:[#allocation1 + $0x18] sm:$0xff pattern:$0x75316420]
        %v251 = vld.sshfl [vmem:[#allocation1 + $0x20] sm:$0xff pattern:$0x75316420]
        %v252 = vld.sshfl [vmem:[#allocation1 + $0x28] sm:$0xff pattern:$0x75316420]
        %v253 = vld.sshfl [vmem:[#allocation1 + $0x30] sm:$0xff pattern:$0x75316420]
        %v254 = vld.sshfl [vmem:[#allocation1 + $0x38] sm:$0xff pattern:$0x75316420]
        %vm263 = vcmask 1043456
        %v264 = vsel %vm263, %v247, 0.0
        %v265 = vsel %vm263, %v248, 0.0
        %v266 = vadd.f32 %v264, %v265
        %v267 = vsel %vm263, %v249, 0.0
        %v268 = vadd.f32 %v266, %v267
        %v269 = vsel %vm263, %v250, 0.0
        %v270 = vadd.f32 %v268, %v269
        %v271 = vsel %vm263, %v251, 0.0
        %v272 = vadd.f32 %v270, %v271
        %v273 = vsel %vm263, %v252, 0.0
        %v274 = vadd.f32 %v272, %v273
        %v275 = vsel %vm263, %v253, 0.0
        %v276 = vadd.f32 %v274, %v275
        %v277 = vsel %vm263, %v254, 0.0
        %v278 = vadd.f32 %v276, %v277
        %279 = vadd.xlane.f32.xlu0 %v278
        %v280 = vpop.xlane.xlu0 %279
        %v281 = vmul.f32 %v228, %v228
        %v282 = vmul.f32 %v229, %v229
        %v283 = vmul.f32 %v230, %v230
        %v284 = vmul.f32 %v231, %v231
        %289 = vst [vmem:[#allocation1] ss:$2 sm:$0xff] %v281
        %s290 = scalar_lea.vmem [#allocation1], 16
        %291 = vst [vmem:[%s290] ss:$2 sm:$0xff] %v282
        %s292 = scalar_lea.vmem [#allocation1], 32
        %293 = vst [vmem:[%s292] ss:$2 sm:$0xff] %v283
        %s294 = scalar_lea.vmem [#allocation1], 48
        %295 = vst [vmem:[%s294] ss:$2 sm:$0xff] %v284
        %v296 = vld.sshfl [vmem:[#allocation1] sm:$0xff pattern:$0x75316420]
        %v297 = vld.sshfl [vmem:[#allocation1 + $0x8] sm:$0xff pattern:$0x75316420]
        %v298 = vld.sshfl [vmem:[#allocation1 + $0x10] sm:$0xff pattern:$0x75316420]
        %v299 = vld.sshfl [vmem:[#allocation1 + $0x18] sm:$0xff pattern:$0x75316420]
        %v300 = vld.sshfl [vmem:[#allocation1 + $0x20] sm:$0xff pattern:$0x75316420]
        %v301 = vld.sshfl [vmem:[#allocation1 + $0x28] sm:$0xff pattern:$0x75316420]
        %v302 = vld.sshfl [vmem:[#allocation1 + $0x30] sm:$0xff pattern:$0x75316420]
        %v303 = vld.sshfl [vmem:[#allocation1 + $0x38] sm:$0xff pattern:$0x75316420]
        %v312 = vsel %vm263, %v296, 0.0
        %v313 = vsel %vm263, %v297, 0.0
        %v314 = vadd.f32 %v312, %v313
        %v315 = vsel %vm263, %v298, 0.0
        %v316 = vadd.f32 %v314, %v315
        %v317 = vsel %vm263, %v299, 0.0
        %v318 = vadd.f32 %v316, %v317
        %v319 = vsel %vm263, %v300, 0.0
        %v320 = vadd.f32 %v318, %v319
        %v321 = vsel %vm263, %v301, 0.0
        %v322 = vadd.f32 %v320, %v321
        %v323 = vsel %vm263, %v302, 0.0
        %v324 = vadd.f32 %v322, %v323
        %v325 = vsel %vm263, %v303, 0.0
        %v326 = vadd.f32 %v324, %v325
        %327 = vadd.xlane.f32.xlu0 %v326
        %v328 = vpop.xlane.xlu0 %327
        %v329 = vmul.f32 %v224, %v224
        %v330 = vmul.f32 %v225, %v225
        %v331 = vmul.f32 %v226, %v226
        %v332 = vmul.f32 %v227, %v227
        %337 = vst [vmem:[#allocation1] ss:$2 sm:$0xff] %v329
        %s338 = scalar_lea.vmem [#allocation1], 16
        %339 = vst [vmem:[%s338] ss:$2 sm:$0xff] %v330
        %s340 = scalar_lea.vmem [#allocation1], 32
        %341 = vst [vmem:[%s340] ss:$2 sm:$0xff] %v331
        %s342 = scalar_lea.vmem [#allocation1], 48
        %343 = vst [vmem:[%s342] ss:$2 sm:$0xff] %v332
        %v344 = vld.sshfl [vmem:[#allocation1] sm:$0xff pattern:$0x75316420]
        %v345 = vld.sshfl [vmem:[#allocation1 + $0x8] sm:$0xff pattern:$0x75316420]
        %v346 = vld.sshfl [vmem:[#allocation1 + $0x10] sm:$0xff pattern:$0x75316420]
        %v347 = vld.sshfl [vmem:[#allocation1 + $0x18] sm:$0xff pattern:$0x75316420]
        %v348 = vld.sshfl [vmem:[#allocation1 + $0x20] sm:$0xff pattern:$0x75316420]
        %v349 = vld.sshfl [vmem:[#allocation1 + $0x28] sm:$0xff pattern:$0x75316420]
        %v350 = vld.sshfl [vmem:[#allocation1 + $0x30] sm:$0xff pattern:$0x75316420]
        %v351 = vld.sshfl [vmem:[#allocation1 + $0x38] sm:$0xff pattern:$0x75316420]
        %v360 = vsel %vm263, %v344, 0.0
        %v361 = vsel %vm263, %v345, 0.0
        %v362 = vadd.f32 %v360, %v361
        %v363 = vsel %vm263, %v346, 0.0
        %v364 = vadd.f32 %v362, %v363
        %v365 = vsel %vm263, %v347, 0.0
        %v366 = vadd.f32 %v364, %v365
        %v367 = vsel %vm263, %v348, 0.0
        %v368 = vadd.f32 %v366, %v367
        %v369 = vsel %vm263, %v349, 0.0
        %v370 = vadd.f32 %v368, %v369
        %v371 = vsel %vm263, %v350, 0.0
        %v372 = vadd.f32 %v370, %v371
        %v373 = vsel %vm263, %v351, 0.0
        %v374 = vadd.f32 %v372, %v373
        %375 = vadd.xlane.f32.xlu0 %v374
        %v376 = vpop.xlane.xlu0 %375
        %v377 = vmul.f32 %v328, %v376
        %v378 = vrsqrt.pop %v377
        %v379 = vmul.f32 %v378, %v377
        %v380 = vmul.f32 %v379, %v378
        %v381 = vmul.f32 0.5, %v380
        %v382 = vsub.f32 1.5, %v381
        %v383 = vmul.f32 %v378, %v382
        %v384 = vmul.f32 %v377, %v383
        %vm385 = vcmp.eq.f32.partialorder %v377, inf
        %v386 = vsel %vm385, %v377, %v384
        %vm387 = vcmp.eq.f32.partialorder %v377, 0.0
        %v388 = vand.u32 %v377, 2147483648
        %v389 = vsel %vm387, %v388, %v386
        %v390 = vsub.f32 0.0, %v280
        %v391 = vadd.f32 %v389, 1e-09
        %v392 = vrcp.pop %v391
        %v393 = vmul.f32 %v391, %v392
        %v394 = vsub.f32 1.0, %v393
        %v395 = vmul.f32 %v392, %v394
        %v396 = vadd.f32 %v392, %v395
        %vm397 = vweird.f32 %v391
        %vm398 = vweird.f32 %v392
        %vm399 = vmor %vm397, %vm398
        %v400 = vsel %vm399, %v392, %v396
        %v401 = vand.u32 2147483647, %v391
        %vm402 = vcmp.eq.f32.partialorder %v401, 8.507059e+37
        %v403 = vand.u32 %v391, 2147483648
        %v404 = vor.u32 1.1754944e-38, %v403
        %v405 = vsel %vm402, %v404, %v400
        %v406 = vmul.f32 %v390, %v405
        %v407 = vlaneseq
        %v408 = vshrl.u32 %v407, 7
        %s409 = smul.u32 %s27, 4
        %v410 = vstv %s409
        %v411 = vadd.s32 %v410, %v408
        %vm412 = vcmp.lt.s32.totalorder %v411, 4
        %v413 = vsel %vm412, %v406, 0.0
        %vm414 = vcmask 3072
        %v415 = vsel %vm414, %v413, 0.0
        %416 = vadd.xlane.f32.xlu0 %v415
        %v417 = vpop.xlane.xlu0 %416
        %v418 = vrot.slane %v417, 4
        %v419 = vadd.f32 %v417, %v418
        %v420 = vrot.slane %v419, 2
        %v421 = vadd.f32 %v419, %v420
        %v422 = vrot.slane %v421, 1
        %v423 = vadd.f32 %v421, %v422
        %s424 = vtos %v423
        %s425 = smul.f32 %s424, 0.25
        %v426 = vstv %s425
        %427 = vst [vmem:[%s223] sm:$0xff] %v426
        %s428 = sand.u32 %s100, 1
        %s429 = scalar_lea.sflag [#allocation4], %s428
        %s430 = sand.u32 %s100, 1
        %s431 = smul.addr %s430, 8
        %s432 = scalar_lea.vmem [#allocation7], %s431
        // Predicated region
        $region37: #{tpu_custom_call.1} parent=27 // pred_check
          %p433 = pneg %p110
        $region38: #{tpu_custom_call.1} parent=27 // pred_check_branch
          %435 = sbr.rel (%p433) target = $region40
        $region39: #{tpu_custom_call.1} parent=27 // pred_region
          %437 = vsyncadd %s429, 0
          %s438 = sadd.s32 %s27, %s26
          %s439 = smul.addr %s438, 8
          %s440 = scalar_lea.hbm %s2, %s439
          %s442 = sshll.u32 %s432, 4
          %s443 = int_to_ptr.vmem [resolvable:$true] %s442
          %s444 = sshll.u32 %s440, 4
          %s445 = int_to_ptr.hbm [resolvable:$true] %s444
          %447 = dma.vmem_to_hbm [thread:$0]  %s443, 128, %s445, %s429
        $region40: #{tpu_custom_call.1} parent=27 // pred_fallthru
          _
      $region28: #{tpu_custom_call.1} parent=5 // pred_fallthru
        _
      %p448 = scmp.le.s32.totalorder 2, %s17
      // Predicated region
      $region41: #{tpu_custom_call.1} parent=5 // pred_check
        %p449 = pneg %p448
      $region42: #{tpu_custom_call.1} parent=5 // pred_check_branch
        %451 = sbr.rel (%p449) target = $region44
      $region43: #{tpu_custom_call.1} parent=5 // pred_region
        %s452 = ssub.s32 %s17, 2
        // Predicated region
        $region45: #{tpu_custom_call.1} parent=43 // pred_check
          %p453 = pneg %p116
        $region46: #{tpu_custom_call.1} parent=43 // pred_check_branch
          %455 = sbr.rel (%p453) target = $region48
        $region47: #{tpu_custom_call.1} parent=43 // pred_region
          %s456 = sand.u32 %s101, 1
          %s457 = scalar_lea.sflag [#allocation4], %s456
          %s458 = sand.u32 %s101, 1
          %s459 = smul.addr %s458, 8
          %s460 = scalar_lea.vmem [#allocation7], %s459
          %462 = dma.done %s457, 128
        $region48: #{tpu_custom_call.1} parent=43 // pred_fallthru
          _
      $region44: #{tpu_custom_call.1} parent=5 // pred_fallthru
        _
    $region6: #{tpu_custom_call.1} parent=1 // loop_footer
      %s21 = sadd.s32 1, %s17
    $region7: #{tpu_custom_call.1} parent=1 // loop_footer_branch
      %16 = sbr.rel target = $region3
    $region8: #{tpu_custom_call.1} parent=1 // loop_exit
      _
    %463 = vsyncpa [#allocation3], 1
    %s464 = scalar_lea.sflag [#allocation3], 1
    %465 = vsyncpa %s464, 1
    %466 = vsyncpa [#allocation6], 1
    %s467 = scalar_lea.sflag [#allocation6], 1
    %468 = vsyncpa %s467, 1
    %469 = vsyncpa [#allocation4], 1
    %s470 = scalar_lea.sflag [#allocation4], 1
    %471 = vsyncpa %s470, 1

</llo_original>
